<compile_context>
chip_gen: v7x
topology: tpu7x:2x2x1
jax: 0.10.0
libtpu: 0.0.40
codegen_flags: <defaults>
</compile_context>

<pallas_src>
import functools

import jax
import jax.numpy as jnp
from jax.experimental import pallas as pl
from jax.experimental.pallas import tpu as pltpu

IN_DIM, HID_DIM, OUT_DIM = 1000, 100, 10        # PyTorch module dims
K_PAD, H_PAD, O_PAD = 1024, 128, 128            # lane-padded kernel dims
DROP_P = 0.2
_DROP_THR = int(DROP_P * 2**32)                 # drop where bits < p * 2^32
_TB_MAX = 512                                   # batch tile (rows per grid step)


def _round_up(n, m):
    return (n + m - 1) // m * m


def _net_kernel_eval(x_ref, w1_ref, b1_ref, w2_ref, b2_ref, o_ref):
    """Eval path: dropout is identity.  bf16 matmul inputs, f32 accumulation."""
    h = jnp.dot(x_ref[...], w1_ref[...], preferred_element_type=jnp.float32)
    h = jnp.maximum(h + b1_ref[...], 0.0)                        # (TB, 128) f32
    y = jnp.dot(h.astype(jnp.bfloat16), w2_ref[...],
                preferred_element_type=jnp.float32)
    o_ref[...] = (y + b2_ref[...]).astype(o_ref.dtype)


def _net_kernel_train(x_ref, bits_ref, w1_ref, b1_ref, w2_ref, b2_ref, o_ref):
    """Training path: inverted dropout via integer-threshold select."""
    h = jnp.dot(x_ref[...], w1_ref[...], preferred_element_type=jnp.float32)
    h = jnp.maximum(h + b1_ref[...], 0.0)
    # Drop with prob p: zero where bits < p * 2^32 (single compare + select).
    h = jnp.where(bits_ref[...] >= jnp.uint32(_DROP_THR), h, 0.0)
    y = jnp.dot(h.astype(jnp.bfloat16), w2_ref[...],
                preferred_element_type=jnp.float32)
    # Fold the 1/(1-p) rescale after fc2 (matmul is linear), then add bias.
    o_ref[...] = (y * jnp.float32(1.0 / (1.0 - DROP_P))
                  + b2_ref[...]).astype(o_ref.dtype)


def pad_params(w1, b1, w2, b2):
    """Zero-pad params to lane multiples; weights stored in bf16 (halves DMA)."""
    w1p = jnp.zeros((K_PAD, H_PAD), jnp.bfloat16)
    w1p = w1p.at[:IN_DIM, :HID_DIM].set(w1.astype(jnp.bfloat16))
    b1p = jnp.zeros((1, H_PAD), jnp.float32).at[:, :HID_DIM].set(b1)
    w2p = jnp.zeros((H_PAD, O_PAD), jnp.bfloat16)
    w2p = w2p.at[:HID_DIM, :OUT_DIM].set(w2.astype(jnp.bfloat16))
    b2p = jnp.zeros((1, O_PAD), jnp.float32).at[:, :OUT_DIM].set(b2)
    return w1p, b1p, w2p, b2p


@functools.partial(jax.jit, static_argnames=("training", "block_b"))
def net_forward(x, w1p, b1p, w2p, b2p, key=None, *, training=False,
                block_b=_TB_MAX):
    """x: (B, 1000) f32 -> (B, 10) f32.  Params must be pre-padded (pad_params)."""
    B = x.shape[0]
    b8 = _round_up(max(B, 1), 8)
    tb = min(block_b, b8)
    bp = _round_up(b8, tb)              # padded batch: multiple of the tile
    grid = (bp // tb,)

    # Pad batch & K, cast activations to bf16 (wrapper-side, fused by XLA).
    xp = jnp.zeros((bp, K_PAD), jnp.bfloat16)
    xp = xp.at[:B, :IN_DIM].set(x.astype(jnp.bfloat16))

    x_spec = pl.BlockSpec((tb, K_PAD), lambda i: (i, 0))
    w1_spec = pl.BlockSpec((K_PAD, H_PAD), lambda i: (0, 0))   # VMEM-resident
    b1_spec = pl.BlockSpec((1, H_PAD), lambda i: (0, 0))
    w2_spec = pl.BlockSpec((H_PAD, O_PAD), lambda i: (0, 0))
    b2_spec = pl.BlockSpec((1, O_PAD), lambda i: (0, 0))
    out_spec = pl.BlockSpec((tb, O_PAD), lambda i: (i, 0))
    out_shape = jax.ShapeDtypeStruct((bp, O_PAD), jnp.float32)
    cparams = pltpu.CompilerParams(dimension_semantics=("parallel",))

    if training:
        # One uint32 per hidden unit per row; independent bits for every row/tile.
        bits = jax.random.bits(key, (bp, H_PAD), dtype=jnp.uint32)
        bits_spec = pl.BlockSpec((tb, H_PAD), lambda i: (i, 0))
        yp = pl.pallas_call(
            _net_kernel_train,
            grid=grid,
            in_specs=[x_spec, bits_spec, w1_spec, b1_spec, w2_spec, b2_spec],
            out_specs=out_spec,
            out_shape=out_shape,
            compiler_params=cparams,
        )(xp, bits, w1p, b1p, w2p, b2p)
    else:
        yp = pl.pallas_call(
            _net_kernel_eval,
            grid=grid,
            in_specs=[x_spec, w1_spec, b1_spec, w2_spec, b2_spec],
            out_specs=out_spec,
            out_shape=out_shape,
            compiler_params=cparams,
        )(xp, w1p, b1p, w2p, b2p)

    return yp[:B, :OUT_DIM]


def init_params(key):
    """PyTorch nn.Linear default init: U[-1/sqrt(fan_in), 1/sqrt(fan_in)]."""
    k1, k2, k3, k4 = jax.random.split(key, 4)
    bound1 = 1.0 / (IN_DIM ** 0.5)
    bound2 = 1.0 / (HID_DIM ** 0.5)
    w1 = jax.random.uniform(k1, (IN_DIM, HID_DIM), jnp.float32, -bound1, bound1)
    b1 = jax.random.uniform(k2, (HID_DIM,), jnp.float32, -bound1, bound1)
    w2 = jax.random.uniform(k3, (HID_DIM, OUT_DIM), jnp.float32, -bound2, bound2)
    b2 = jax.random.uniform(k4, (OUT_DIM,), jnp.float32, -bound2, bound2)
    return w1, b1, w2, b2


if __name__ == "__main__":
    key = jax.random.PRNGKey(0)
    k_params, k_x, k_drop = jax.random.split(key, 3)
    w1, b1, w2, b2 = init_params(k_params)
    w1p, b1p, w2p, b2p = pad_params(w1, b1, w2, b2)

    B = 8
    x = jax.random.normal(k_x, (B, IN_DIM), dtype=jnp.float32)

    # Inference forward (dropout = identity), deterministic.
    out = jax.block_until_ready(
        net_forward(x, w1p, b1p, w2p, b2p, training=False))
    assert out.shape == (B, OUT_DIM)

    # Reference with matching bf16 matmul inputs / f32 accumulation.
    h_ref = jnp.dot(x.astype(jnp.bfloat16), w1.astype(jnp.bfloat16),
                    preferred_element_type=jnp.float32) + b1
    h_ref = jnp.maximum(h_ref, 0.0)
    ref = jnp.dot(h_ref.astype(jnp.bfloat16), w2.astype(jnp.bfloat16),
                  preferred_element_type=jnp.float32) + b2
    assert jnp.allclose(out, ref, atol=5e-3, rtol=5e-3), "mismatch vs JAX reference"

    # Training path (stochastic dropout): sanity-check shape / finiteness.
    out_train = jax.block_until_ready(
        net_forward(x, w1p, b1p, w2p, b2p, k_drop, training=True))
    assert out_train.shape == (B, OUT_DIM)
    assert bool(jnp.all(jnp.isfinite(out_train)))

    print("KERNEL_OK")
</pallas_src>

<mosaic_0001>
module attributes {stable_mosaic.version = 11 : i64} {
  func.func @_net_kernel_eval(%arg0: i32, %arg1: memref<8x1024xbf16, #tpu.memory_space<vmem>>, %arg2: memref<1024x128xbf16, #tpu.memory_space<vmem>>, %arg3: memref<1x128xf32, #tpu.memory_space<vmem>>, %arg4: memref<128x128xbf16, #tpu.memory_space<vmem>>, %arg5: memref<1x128xf32, #tpu.memory_space<vmem>>, %arg6: memref<8x128xf32, #tpu.memory_space<vmem>>) attributes {dimension_semantics = [#tpu.dimension_semantics<parallel>], iteration_bounds = array<i64: 1>, scalar_prefetch = 0 : i64, scratch_operands = 0 : i64, tpu.core_type = #tpu.core_type<tc>, window_params = [{transform_indices = @transform_0, window_bounds = array<i64: 8, 1024>}, {pipeline_mode = #tpu.pipeline_mode<synchronous>, transform_indices = @transform_1, window_bounds = array<i64: 1024, 128>}, {pipeline_mode = #tpu.pipeline_mode<synchronous>, transform_indices = @transform_2, window_bounds = array<i64: 1, 128>}, {pipeline_mode = #tpu.pipeline_mode<synchronous>, transform_indices = @transform_3, window_bounds = array<i64: 128, 128>}, {pipeline_mode = #tpu.pipeline_mode<synchronous>, transform_indices = @transform_4, window_bounds = array<i64: 1, 128>}, {transform_indices = @transform_5, window_bounds = array<i64: 8, 128>}]} {
    %c0 = arith.constant 0 : index
    %c0_0 = arith.constant 0 : index
    %0 = vector.load %arg1[%c0, %c0_0] : memref<8x1024xbf16, #tpu.memory_space<vmem>>, vector<8x1024xbf16>
    %c0_1 = arith.constant 0 : index
    %c0_2 = arith.constant 0 : index
    %1 = vector.load %arg2[%c0_1, %c0_2] : memref<1024x128xbf16, #tpu.memory_space<vmem>>, vector<1024x128xbf16>
    %cst = arith.constant dense<0.000000e+00> : vector<8x128xf32>
    %2 = tpu.matmul %0, %1, %cst {dimension_numbers = #tpu.dot_dimension_numbers<[1], [0], [0], [1], [0, 0, 1, 1], [], []>} : vector<8x1024xbf16>, vector<1024x128xbf16>, vector<8x128xf32> -> vector<8x128xf32>
    %c0_3 = arith.constant 0 : index
    %c0_4 = arith.constant 0 : index
    %3 = vector.load %arg3[%c0_3, %c0_4] : memref<1x128xf32, #tpu.memory_space<vmem>>, vector<1x128xf32>
    %4 = vector.broadcast %3 : vector<1x128xf32> to vector<8x128xf32>
    %5 = arith.addf %2, %4 : vector<8x128xf32>
    %cst_5 = arith.constant 0.000000e+00 : f32
    %6 = vector.broadcast %cst_5 : f32 to vector<8x128xf32>
    %7 = arith.maximumf %5, %6 : vector<8x128xf32>
    %8 = arith.truncf %7 : vector<8x128xf32> to vector<8x128xbf16>
    %c0_6 = arith.constant 0 : index
    %c0_7 = arith.constant 0 : index
    %9 = vector.load %arg4[%c0_6, %c0_7] : memref<128x128xbf16, #tpu.memory_space<vmem>>, vector<128x128xbf16>
    %cst_8 = arith.constant dense<0.000000e+00> : vector<8x128xf32>
    %10 = tpu.matmul %8, %9, %cst_8 {dimension_numbers = #tpu.dot_dimension_numbers<[1], [0], [0], [1], [0, 0, 1, 1], [], []>} : vector<8x128xbf16>, vector<128x128xbf16>, vector<8x128xf32> -> vector<8x128xf32>
    %c0_9 = arith.constant 0 : index
    %c0_10 = arith.constant 0 : index
    %11 = vector.load %arg5[%c0_9, %c0_10] : memref<1x128xf32, #tpu.memory_space<vmem>>, vector<1x128xf32>
    %12 = vector.broadcast %11 : vector<1x128xf32> to vector<8x128xf32>
    %13 = arith.addf %10, %12 : vector<8x128xf32>
    %c0_11 = arith.constant 0 : index
    %c0_12 = arith.constant 0 : index
    %14 = vector.load %arg6[%c0_11, %c0_12] : memref<8x128xf32, #tpu.memory_space<vmem>>, vector<8x128xf32>
    tpu.vector_store %arg6[%c0_11, %c0_12], %13 {strides = array<i32>} : memref<8x128xf32, #tpu.memory_space<vmem>>, vector<8x128xf32>,
    return
  }
  func.func @transform_0(%arg0: i32) -> (i32, i32) {
    %c0_i32 = arith.constant 0 : i32
    %c0_i32_0 = arith.constant 0 : i32
    return %arg0, %c0_i32 : i32, i32
  }
  func.func @transform_1(%arg0: i32) -> (i32, i32) {
    %c0_i32 = arith.constant 0 : i32
    %c0_i32_0 = arith.constant 0 : i32
    %c0_i32_1 = arith.constant 0 : i32
    return %c0_i32, %c0_i32_0 : i32, i32
  }
  func.func @transform_2(%arg0: i32) -> (i32, i32) {
    %c0_i32 = arith.constant 0 : i32
    %c0_i32_0 = arith.constant 0 : i32
    %c0_i32_1 = arith.constant 0 : i32
    return %c0_i32, %c0_i32_0 : i32, i32
  }
  func.func @transform_3(%arg0: i32) -> (i32, i32) {
    %c0_i32 = arith.constant 0 : i32
    %c0_i32_0 = arith.constant 0 : i32
    %c0_i32_1 = arith.constant 0 : i32
    return %c0_i32, %c0_i32_0 : i32, i32
  }
  func.func @transform_4(%arg0: i32) -> (i32, i32) {
    %c0_i32 = arith.constant 0 : i32
    %c0_i32_0 = arith.constant 0 : i32
    %c0_i32_1 = arith.constant 0 : i32
    return %c0_i32, %c0_i32_0 : i32, i32
  }
  func.func @transform_5(%arg0: i32) -> (i32, i32) {
    %c0_i32 = arith.constant 0 : i32
    %c0_i32_0 = arith.constant 0 : i32
    return %arg0, %c0_i32 : i32, i32
  }
}

</mosaic_0001>

<llo_original>
// kernel: net_forward.1
$region0: #{net_forward.1}
  #allocation0 [shape = 'u32[]', space=smem, size = 0x4, offset = 0x4, fixed_abs, tag = 'smem constant byte address 0x4 - core index']
  #allocation1 [shape = 'u32[144,128]{1,0:T(1,128)}', space=vmem, size = 0x12000, scoped, tag = 'internal scratch']
  %s0 = inlined_call_operand.vmem [shape: bf16[8,1024], index: 0, kind: input, shape index: {}]
  %s1 = inlined_call_operand.hbm [shape: bf16[1024,128], index: 1, kind: input, shape index: {}]
  %s2 = inlined_call_operand.vmem [shape: f32[1,128], index: 2, kind: input, shape index: {}]
  %s3 = inlined_call_operand.vmem [shape: bf16[128,128], index: 3, kind: input, shape index: {}]
  %s4 = inlined_call_operand.vmem [shape: f32[1,128], index: 4, kind: input, shape index: {}]
  %s5 = inlined_call_operand.hbm [shape: f32[8,128], index: 5, kind: output, shape index: {}]
  %s6 = sld [smem:[#allocation0]]
  $region34: #{net_forward.1} parent=0
    _
  %s8 = ssub.s32 1, %s6
  %s9 = scalar_select 0, %s8, %s6
  $region1: #{net_forward.1} parent=0
    #allocation2 [shape = 'u8[262144]{0}', space=vmem, size = 0x40000, scoped, tag = 'input window, operand 1, single buffered']
    #allocation3 [shape = 's32[1]{0}', space=sflag, size = 0x4, scoped, tag = 'scoped memory for net_forward.1']
    #allocation4 [shape = 's32[1]{0}', space=sflag, size = 0x4, scoped, tag = 'scoped memory for net_forward.1']
    #allocation5 [shape = 'u8[4096]{0}', space=vmem, size = 0x1000, scoped, tag = 'output window, operand 0, single buffered']
    %10 = vsyncpa [#allocation3], 0
    %11 = vsyncpa [#allocation4], 0
    // Predicated region
    $region2: #{net_forward.1} parent=1 // pred_check
      _
    $region3: #{net_forward.1} parent=1 // pred_check_branch
      %13 = sbr.rel (0) target = $region5
    $region4: #{net_forward.1} parent=1 // pred_region
      _
    $region5: #{net_forward.1} parent=1 // pred_fallthru
      _
    // Predicated region
    $region6: #{net_forward.1} parent=1 // pred_check
      _
    $region7: #{net_forward.1} parent=1 // pred_check_branch
      %15 = sbr.rel (0) target = $region9
    $region8: #{net_forward.1} parent=1 // pred_region
      %s17 = ssub.s32 8192, 8192
      %18 = vsyncadd [#allocation3], %s17
      %s19 = sshll.u32 [#allocation2], 4
      %s20 = int_to_ptr.vmem [resolvable:$true] %s19
      %25 = dma.hbm_to_vmem [thread:$0]  %s1, 8192, %s20, [#allocation3], 64, 64, 4
    $region9: #{net_forward.1} parent=1 // pred_fallthru
      _
    // Predicated region
    $region10: #{net_forward.1} parent=1 // pred_check
      _
    $region11: #{net_forward.1} parent=1 // pred_check_branch
      %27 = sbr.rel (0) target = $region13
    $region12: #{net_forward.1} parent=1 // pred_region
      _
    $region13: #{net_forward.1} parent=1 // pred_fallthru
      _
    // Predicated region
    $region14: #{net_forward.1} parent=1 // pred_check
      _
    $region15: #{net_forward.1} parent=1 // pred_check_branch
      %29 = sbr.rel (0) target = $region17
    $region16: #{net_forward.1} parent=1 // pred_region
      _
    $region17: #{net_forward.1} parent=1 // pred_fallthru
      _
    // Predicated region
    $region18: #{net_forward.1} parent=1 // pred_check
      _
    $region19: #{net_forward.1} parent=1 // pred_check_branch
      %31 = sbr.rel (0) target = $region21
    $region20: #{net_forward.1} parent=1 // pred_region
      _
    $region21: #{net_forward.1} parent=1 // pred_fallthru
      _
    // Predicated region
    $region22: #{net_forward.1} parent=1 // pred_check
      _
    $region23: #{net_forward.1} parent=1 // pred_check_branch
      %33 = sbr.rel (0) target = $region25
    $region24: #{net_forward.1} parent=1 // pred_region
      %34 = dma.done [#allocation3], 8192
    $region25: #{net_forward.1} parent=1 // pred_fallthru
      _
    %v36 = vld [vmem:[%s0] sm:$0xff]
    %v37 = vld [vmem:[%s0 + $0x8] sm:$0xff]
    %v38 = vld [vmem:[%s0 + $0x10] sm:$0xff]
    %v39 = vld [vmem:[%s0 + $0x18] sm:$0xff]
    %v40 = vld [vmem:[#allocation2] sm:$0xf]
    %v41 = vld [vmem:[#allocation2 + $0x4] sm:$0xf]
    %v42 = vld [vmem:[#allocation2 + $0x8] sm:$0xf]
    %v43 = vld [vmem:[#allocation2 + $0xc] sm:$0xf]
    %v44 = vld [vmem:[#allocation2 + $0x10] sm:$0xf]
    %v45 = vld [vmem:[#allocation2 + $0x14] sm:$0xf]
    %v46 = vld [vmem:[#allocation2 + $0x18] sm:$0xf]
    %v47 = vld [vmem:[#allocation2 + $0x1c] sm:$0xf]
    %v48 = vld [vmem:[#allocation2 + $0x20] sm:$0xf]
    %v49 = vld [vmem:[#allocation2 + $0x24] sm:$0xf]
    %v50 = vld [vmem:[#allocation2 + $0x28] sm:$0xf]
    %v51 = vld [vmem:[#allocation2 + $0x2c] sm:$0xf]
    %v52 = vld [vmem:[#allocation2 + $0x30] sm:$0xf]
    %v53 = vld [vmem:[#allocation2 + $0x34] sm:$0xf]
    %v54 = vld [vmem:[#allocation2 + $0x38] sm:$0xf]
    %v55 = vld [vmem:[#allocation2 + $0x3c] sm:$0xf]
    %v56 = vld [vmem:[#allocation2 + $0x40] sm:$0xf]
    %v57 = vld [vmem:[#allocation2 + $0x44] sm:$0xf]
    %v58 = vld [vmem:[#allocation2 + $0x48] sm:$0xf]
    %v59 = vld [vmem:[#allocation2 + $0x4c] sm:$0xf]
    %v60 = vld [vmem:[#allocation2 + $0x50] sm:$0xf]
    %v61 = vld [vmem:[#allocation2 + $0x54] sm:$0xf]
    %v62 = vld [vmem:[#allocation2 + $0x58] sm:$0xf]
    %v63 = vld [vmem:[#allocation2 + $0x5c] sm:$0xf]
    %v64 = vld [vmem:[#allocation2 + $0x60] sm:$0xf]
    %v65 = vld [vmem:[#allocation2 + $0x64] sm:$0xf]
    %v66 = vld [vmem:[#allocation2 + $0x68] sm:$0xf]
    %v67 = vld [vmem:[#allocation2 + $0x6c] sm:$0xf]
    %v68 = vld [vmem:[#allocation2 + $0x70] sm:$0xf]
    %v69 = vld [vmem:[#allocation2 + $0x74] sm:$0xf]
    %v70 = vld [vmem:[#allocation2 + $0x78] sm:$0xf]
    %v71 = vld [vmem:[#allocation2 + $0x7c] sm:$0xf]
    %v72 = vld [vmem:[#allocation2 + $0x80] sm:$0xf]
    %v73 = vld [vmem:[#allocation2 + $0x84] sm:$0xf]
    %v74 = vld [vmem:[#allocation2 + $0x88] sm:$0xf]
    %v75 = vld [vmem:[#allocation2 + $0x8c] sm:$0xf]
    %v76 = vld [vmem:[#allocation2 + $0x90] sm:$0xf]
    %v77 = vld [vmem:[#allocation2 + $0x94] sm:$0xf]
    %v78 = vld [vmem:[#allocation2 + $0x98] sm:$0xf]
    %v79 = vld [vmem:[#allocation2 + $0x9c] sm:$0xf]
    %v80 = vld [vmem:[#allocation2 + $0xa0] sm:$0xf]
    %v81 = vld [vmem:[#allocation2 + $0xa4] sm:$0xf]
    %v82 = vld [vmem:[#allocation2 + $0xa8] sm:$0xf]
    %v83 = vld [vmem:[#allocation2 + $0xac] sm:$0xf]
    %v84 = vld [vmem:[#allocation2 + $0xb0] sm:$0xf]
    %v85 = vld [vmem:[#allocation2 + $0xb4] sm:$0xf]
    %v86 = vld [vmem:[#allocation2 + $0xb8] sm:$0xf]
    %v87 = vld [vmem:[#allocation2 + $0xbc] sm:$0xf]
    %v88 = vld [vmem:[#allocation2 + $0xc0] sm:$0xf]
    %v89 = vld [vmem:[#allocation2 + $0xc4] sm:$0xf]
    %v90 = vld [vmem:[#allocation2 + $0xc8] sm:$0xf]
    %v91 = vld [vmem:[#allocation2 + $0xcc] sm:$0xf]
    %v92 = vld [vmem:[#allocation2 + $0xd0] sm:$0xf]
    %v93 = vld [vmem:[#allocation2 + $0xd4] sm:$0xf]
    %v94 = vld [vmem:[#allocation2 + $0xd8] sm:$0xf]
    %v95 = vld [vmem:[#allocation2 + $0xdc] sm:$0xf]
    %v96 = vld [vmem:[#allocation2 + $0xe0] sm:$0xf]
    %v97 = vld [vmem:[#allocation2 + $0xe4] sm:$0xf]
    %v98 = vld [vmem:[#allocation2 + $0xe8] sm:$0xf]
    %v99 = vld [vmem:[#allocation2 + $0xec] sm:$0xf]
    %v100 = vld [vmem:[#allocation2 + $0xf0] sm:$0xf]
    %v101 = vld [vmem:[#allocation2 + $0xf4] sm:$0xf]
    %v102 = vld [vmem:[#allocation2 + $0xf8] sm:$0xf]
    %v103 = vld [vmem:[#allocation2 + $0xfc] sm:$0xf]
    %v104 = vld [vmem:[#allocation2 + $0x100] sm:$0xf]
    %v105 = vld [vmem:[#allocation2 + $0x104] sm:$0xf]
    %v106 = vld [vmem:[#allocation2 + $0x108] sm:$0xf]
    %v107 = vld [vmem:[#allocation2 + $0x10c] sm:$0xf]
    %v108 = vld [vmem:[#allocation2 + $0x110] sm:$0xf]
    %v109 = vld [vmem:[#allocation2 + $0x114] sm:$0xf]
    %v110 = vld [vmem:[#allocation2 + $0x118] sm:$0xf]
    %v111 = vld [vmem:[#allocation2 + $0x11c] sm:$0xf]
    %v112 = vld [vmem:[#allocation2 + $0x120] sm:$0xf]
    %v113 = vld [vmem:[#allocation2 + $0x124] sm:$0xf]
    %v114 = vld [vmem:[#allocation2 + $0x128] sm:$0xf]
    %v115 = vld [vmem:[#allocation2 + $0x12c] sm:$0xf]
    %v116 = vld [vmem:[#allocation2 + $0x130] sm:$0xf]
    %v117 = vld [vmem:[#allocation2 + $0x134] sm:$0xf]
    %v118 = vld [vmem:[#allocation2 + $0x138] sm:$0xf]
    %v119 = vld [vmem:[#allocation2 + $0x13c] sm:$0xf]
    %v120 = vld [vmem:[#allocation2 + $0x140] sm:$0xf]
    %v121 = vld [vmem:[#allocation2 + $0x144] sm:$0xf]
    %v122 = vld [vmem:[#allocation2 + $0x148] sm:$0xf]
    %v123 = vld [vmem:[#allocation2 + $0x14c] sm:$0xf]
    %v124 = vld [vmem:[#allocation2 + $0x150] sm:$0xf]
    %v125 = vld [vmem:[#allocation2 + $0x154] sm:$0xf]
    %v126 = vld [vmem:[#allocation2 + $0x158] sm:$0xf]
    %v127 = vld [vmem:[#allocation2 + $0x15c] sm:$0xf]
    %v128 = vld [vmem:[#allocation2 + $0x160] sm:$0xf]
    %v129 = vld [vmem:[#allocation2 + $0x164] sm:$0xf]
    %v130 = vld [vmem:[#allocation2 + $0x168] sm:$0xf]
    %v131 = vld [vmem:[#allocation2 + $0x16c] sm:$0xf]
    %v132 = vld [vmem:[#allocation2 + $0x170] sm:$0xf]
    %v133 = vld [vmem:[#allocation2 + $0x174] sm:$0xf]
    %v134 = vld [vmem:[#allocation2 + $0x178] sm:$0xf]
    %v135 = vld [vmem:[#allocation2 + $0x17c] sm:$0xf]
    %v136 = vld [vmem:[#allocation2 + $0x180] sm:$0xf]
    %v137 = vld [vmem:[#allocation2 + $0x184] sm:$0xf]
    %v138 = vld [vmem:[#allocation2 + $0x188] sm:$0xf]
    %v139 = vld [vmem:[#allocation2 + $0x18c] sm:$0xf]
    %v140 = vld [vmem:[#allocation2 + $0x190] sm:$0xf]
    %v141 = vld [vmem:[#allocation2 + $0x194] sm:$0xf]
    %v142 = vld [vmem:[#allocation2 + $0x198] sm:$0xf]
    %v143 = vld [vmem:[#allocation2 + $0x19c] sm:$0xf]
    %v144 = vld [vmem:[#allocation2 + $0x1a0] sm:$0xf]
    %v145 = vld [vmem:[#allocation2 + $0x1a4] sm:$0xf]
    %v146 = vld [vmem:[#allocation2 + $0x1a8] sm:$0xf]
    %v147 = vld [vmem:[#allocation2 + $0x1ac] sm:$0xf]
    %v148 = vld [vmem:[#allocation2 + $0x1b0] sm:$0xf]
    %v149 = vld [vmem:[#allocation2 + $0x1b4] sm:$0xf]
    %v150 = vld [vmem:[#allocation2 + $0x1b8] sm:$0xf]
    %v151 = vld [vmem:[#allocation2 + $0x1bc] sm:$0xf]
    %v152 = vld [vmem:[#allocation2 + $0x1c0] sm:$0xf]
    %v153 = vld [vmem:[#allocation2 + $0x1c4] sm:$0xf]
    %v154 = vld [vmem:[#allocation2 + $0x1c8] sm:$0xf]
    %v155 = vld [vmem:[#allocation2 + $0x1cc] sm:$0xf]
    %v156 = vld [vmem:[#allocation2 + $0x1d0] sm:$0xf]
    %v157 = vld [vmem:[#allocation2 + $0x1d4] sm:$0xf]
    %v158 = vld [vmem:[#allocation2 + $0x1d8] sm:$0xf]
    %v159 = vld [vmem:[#allocation2 + $0x1dc] sm:$0xf]
    %v160 = vld [vmem:[#allocation2 + $0x1e0] sm:$0xf]
    %v161 = vld [vmem:[#allocation2 + $0x1e4] sm:$0xf]
    %v162 = vld [vmem:[#allocation2 + $0x1e8] sm:$0xf]
    %v163 = vld [vmem:[#allocation2 + $0x1ec] sm:$0xf]
    %v164 = vld [vmem:[#allocation2 + $0x1f0] sm:$0xf]
    %v165 = vld [vmem:[#allocation2 + $0x1f4] sm:$0xf]
    %v166 = vld [vmem:[#allocation2 + $0x1f8] sm:$0xf]
    %v167 = vld [vmem:[#allocation2 + $0x1fc] sm:$0xf]
    %v168 = vld [vmem:[%s2] sm:$0x1]
    %v170 = vlaneseq
    %v171 = vshrl.u32 %v170, 7
    %v172 = vsub.s32 0, %v171
    %v173 = vrot.slane %v168, %v172
    %v179 = vunpack.c.l.b16 %v36
    %v180 = vunpack.c.h.b16 %v36
    %v181 = vunpack.c.l.b16 %v37
    %v182 = vunpack.c.h.b16 %v37
    %v183 = vunpack.c.l.b16 %v38
    %v184 = vunpack.c.h.b16 %v38
    %v185 = vunpack.c.l.b16 %v39
    %v186 = vunpack.c.h.b16 %v39
    %v187 = vpack.c.b16 %v179, %v179
    %v188 = vpack.c.b16 %v180, %v180
    %v189 = vpack.c.b16 %v181, %v181
    %v190 = vpack.c.b16 %v182, %v182
    %v191 = vpack.c.b16 %v183, %v183
    %v192 = vpack.c.b16 %v184, %v184
    %v193 = vpack.c.b16 %v185, %v185
    %v194 = vpack.c.b16 %v186, %v186
    %v331 = vunpack.c.l.b16 %v40
    %v332 = vunpack.c.l.b16 %v41
    %v333 = vunpack.c.l.b16 %v42
    %v334 = vunpack.c.l.b16 %v43
    %v335 = vunpack.c.l.b16 %v44
    %v336 = vunpack.c.l.b16 %v45
    %v337 = vunpack.c.l.b16 %v46
    %v338 = vunpack.c.l.b16 %v47
    %v339 = vunpack.c.l.b16 %v48
    %v340 = vunpack.c.l.b16 %v49
    %v341 = vunpack.c.l.b16 %v50
    %v342 = vunpack.c.l.b16 %v51
    %v343 = vunpack.c.l.b16 %v52
    %v344 = vunpack.c.l.b16 %v53
    %v345 = vunpack.c.l.b16 %v54
    %v346 = vunpack.c.l.b16 %v55
    %v347 = vunpack.c.l.b16 %v56
    %v348 = vunpack.c.l.b16 %v57
    %v349 = vunpack.c.l.b16 %v58
    %v350 = vunpack.c.l.b16 %v59
    %v351 = vunpack.c.l.b16 %v60
    %v352 = vunpack.c.l.b16 %v61
    %v353 = vunpack.c.l.b16 %v62
    %v354 = vunpack.c.l.b16 %v63
    %v355 = vunpack.c.l.b16 %v64
    %v356 = vunpack.c.l.b16 %v65
    %v357 = vunpack.c.l.b16 %v66
    %v358 = vunpack.c.l.b16 %v67
    %v359 = vunpack.c.l.b16 %v68
    %v360 = vunpack.c.l.b16 %v69
    %v361 = vunpack.c.l.b16 %v70
    %v362 = vunpack.c.l.b16 %v71
    %v363 = vunpack.c.l.b16 %v72
    %v364 = vunpack.c.l.b16 %v73
    %v365 = vunpack.c.l.b16 %v74
    %v366 = vunpack.c.l.b16 %v75
    %v367 = vunpack.c.l.b16 %v76
    %v368 = vunpack.c.l.b16 %v77
    %v369 = vunpack.c.l.b16 %v78
    %v370 = vunpack.c.l.b16 %v79
    %v371 = vunpack.c.l.b16 %v80
    %v372 = vunpack.c.l.b16 %v81
    %v373 = vunpack.c.l.b16 %v82
    %v374 = vunpack.c.l.b16 %v83
    %v375 = vunpack.c.l.b16 %v84
    %v376 = vunpack.c.l.b16 %v85
    %v377 = vunpack.c.l.b16 %v86
    %v378 = vunpack.c.l.b16 %v87
    %v379 = vunpack.c.l.b16 %v88
    %v380 = vunpack.c.l.b16 %v89
    %v381 = vunpack.c.l.b16 %v90
    %v382 = vunpack.c.l.b16 %v91
    %v383 = vunpack.c.l.b16 %v92
    %v384 = vunpack.c.l.b16 %v93
    %v385 = vunpack.c.l.b16 %v94
    %v386 = vunpack.c.l.b16 %v95
    %v387 = vunpack.c.l.b16 %v96
    %v388 = vunpack.c.l.b16 %v97
    %v389 = vunpack.c.l.b16 %v98
    %v390 = vunpack.c.l.b16 %v99
    %v391 = vunpack.c.l.b16 %v100
    %v392 = vunpack.c.l.b16 %v101
    %v393 = vunpack.c.l.b16 %v102
    %v394 = vunpack.c.l.b16 %v103
    %v395 = vunpack.c.l.b16 %v104
    %v396 = vunpack.c.l.b16 %v105
    %v397 = vunpack.c.l.b16 %v106
    %v398 = vunpack.c.l.b16 %v107
    %v399 = vunpack.c.l.b16 %v108
    %v400 = vunpack.c.l.b16 %v109
    %v401 = vunpack.c.l.b16 %v110
    %v402 = vunpack.c.l.b16 %v111
    %v403 = vunpack.c.l.b16 %v112
    %v404 = vunpack.c.l.b16 %v113
    %v405 = vunpack.c.l.b16 %v114
    %v406 = vunpack.c.l.b16 %v115
    %v407 = vunpack.c.l.b16 %v116
    %v408 = vunpack.c.l.b16 %v117
    %v409 = vunpack.c.l.b16 %v118
    %v410 = vunpack.c.l.b16 %v119
    %v411 = vunpack.c.l.b16 %v120
    %v412 = vunpack.c.l.b16 %v121
    %v413 = vunpack.c.l.b16 %v122
    %v414 = vunpack.c.l.b16 %v123
    %v415 = vunpack.c.l.b16 %v124
    %v416 = vunpack.c.l.b16 %v125
    %v417 = vunpack.c.l.b16 %v126
    %v418 = vunpack.c.l.b16 %v127
    %v419 = vunpack.c.l.b16 %v128
    %v420 = vunpack.c.l.b16 %v129
    %v421 = vunpack.c.l.b16 %v130
    %v422 = vunpack.c.l.b16 %v131
    %v423 = vunpack.c.l.b16 %v132
    %v424 = vunpack.c.l.b16 %v133
    %v425 = vunpack.c.l.b16 %v134
    %v426 = vunpack.c.l.b16 %v135
    %v427 = vunpack.c.l.b16 %v136
    %v428 = vunpack.c.l.b16 %v137
    %v429 = vunpack.c.l.b16 %v138
    %v430 = vunpack.c.l.b16 %v139
    %v431 = vunpack.c.l.b16 %v140
    %v432 = vunpack.c.l.b16 %v141
    %v433 = vunpack.c.l.b16 %v142
    %v434 = vunpack.c.l.b16 %v143
    %v435 = vunpack.c.l.b16 %v144
    %v436 = vunpack.c.l.b16 %v145
    %v437 = vunpack.c.l.b16 %v146
    %v438 = vunpack.c.l.b16 %v147
    %v439 = vunpack.c.l.b16 %v148
    %v440 = vunpack.c.l.b16 %v149
    %v441 = vunpack.c.l.b16 %v150
    %v442 = vunpack.c.l.b16 %v151
    %v443 = vunpack.c.l.b16 %v152
    %v444 = vunpack.c.l.b16 %v153
    %v445 = vunpack.c.l.b16 %v154
    %v446 = vunpack.c.l.b16 %v155
    %v447 = vunpack.c.l.b16 %v156
    %v448 = vunpack.c.l.b16 %v157
    %v449 = vunpack.c.l.b16 %v158
    %v450 = vunpack.c.l.b16 %v159
    %v451 = vunpack.c.l.b16 %v160
    %v452 = vunpack.c.l.b16 %v161
    %v453 = vunpack.c.l.b16 %v162
    %v454 = vunpack.c.l.b16 %v163
    %v455 = vunpack.c.l.b16 %v164
    %v456 = vunpack.c.l.b16 %v165
    %v457 = vunpack.c.l.b16 %v166
    %v458 = vunpack.c.l.b16 %v167
    %v459 = vpack.c.b16 %v332, %v331
    %v460 = vpack.c.b16 %v334, %v333
    %v461 = vpack.c.b16 %v336, %v335
    %v462 = vpack.c.b16 %v338, %v337
    %v463 = vpack.c.b16 %v340, %v339
    %v464 = vpack.c.b16 %v342, %v341
    %v465 = vpack.c.b16 %v344, %v343
    %v466 = vpack.c.b16 %v346, %v345
    %v467 = vpack.c.b16 %v348, %v347
    %v468 = vpack.c.b16 %v350, %v349
    %v469 = vpack.c.b16 %v352, %v351
    %v470 = vpack.c.b16 %v354, %v353
    %v471 = vpack.c.b16 %v356, %v355
    %v472 = vpack.c.b16 %v358, %v357
    %v473 = vpack.c.b16 %v360, %v359
    %v474 = vpack.c.b16 %v362, %v361
    %v475 = vpack.c.b16 %v364, %v363
    %v476 = vpack.c.b16 %v366, %v365
    %v477 = vpack.c.b16 %v368, %v367
    %v478 = vpack.c.b16 %v370, %v369
    %v479 = vpack.c.b16 %v372, %v371
    %v480 = vpack.c.b16 %v374, %v373
    %v481 = vpack.c.b16 %v376, %v375
    %v482 = vpack.c.b16 %v378, %v377
    %v483 = vpack.c.b16 %v380, %v379
    %v484 = vpack.c.b16 %v382, %v381
    %v485 = vpack.c.b16 %v384, %v383
    %v486 = vpack.c.b16 %v386, %v385
    %v487 = vpack.c.b16 %v388, %v387
    %v488 = vpack.c.b16 %v390, %v389
    %v489 = vpack.c.b16 %v392, %v391
    %v490 = vpack.c.b16 %v394, %v393
    %v491 = vpack.c.b16 %v396, %v395
    %v492 = vpack.c.b16 %v398, %v397
    %v493 = vpack.c.b16 %v400, %v399
    %v494 = vpack.c.b16 %v402, %v401
    %v495 = vpack.c.b16 %v404, %v403
    %v496 = vpack.c.b16 %v406, %v405
    %v497 = vpack.c.b16 %v408, %v407
    %v498 = vpack.c.b16 %v410, %v409
    %v499 = vpack.c.b16 %v412, %v411
    %v500 = vpack.c.b16 %v414, %v413
    %v501 = vpack.c.b16 %v416, %v415
    %v502 = vpack.c.b16 %v418, %v417
    %v503 = vpack.c.b16 %v420, %v419
    %v504 = vpack.c.b16 %v422, %v421
    %v505 = vpack.c.b16 %v424, %v423
    %v506 = vpack.c.b16 %v426, %v425
    %v507 = vpack.c.b16 %v428, %v427
    %v508 = vpack.c.b16 %v430, %v429
    %v509 = vpack.c.b16 %v432, %v431
    %v510 = vpack.c.b16 %v434, %v433
    %v511 = vpack.c.b16 %v436, %v435
    %v512 = vpack.c.b16 %v438, %v437
    %v513 = vpack.c.b16 %v440, %v439
    %v514 = vpack.c.b16 %v442, %v441
    %v515 = vpack.c.b16 %v444, %v443
    %v516 = vpack.c.b16 %v446, %v445
    %v517 = vpack.c.b16 %v448, %v447
    %v518 = vpack.c.b16 %v450, %v449
    %v519 = vpack.c.b16 %v452, %v451
    %v520 = vpack.c.b16 %v454, %v453
    %v521 = vpack.c.b16 %v456, %v455
    %v522 = vpack.c.b16 %v458, %v457
    %587 = vmatprep.subr.bf16.mxu0 0
    %588 = vmatpush1.bf16.msra.mxu0 %v459
    %589 = vmatprep.subr.bf16.mxu0 0
    %590 = vmatpush1.bf16.msra.mxu0 %v460
    %591 = vmatprep.subr.bf16.mxu0 0
    %592 = vmatpush1.bf16.msra.mxu0 %v461
    %593 = vmatprep.subr.bf16.mxu0 0
    %594 = vmatpush1.bf16.msra.mxu0 %v462
    %595 = vmatprep.subr.bf16.mxu0 0
    %596 = vmatpush1.bf16.msra.mxu0 %v463
    %597 = vmatprep.subr.bf16.mxu0 0
    %598 = vmatpush1.bf16.msra.mxu0 %v464
    %599 = vmatprep.subr.bf16.mxu0 0
    %600 = vmatpush1.bf16.msra.mxu0 %v465
    %601 = vmatprep.subr.bf16.mxu0 0
    %602 = vmatpush1.bf16.msra.mxu0 %v466
    %603 = vmatprep.subr.bf16.mxu0 0
    %604 = vmatpush1.bf16.msra.mxu0 %v467
    %605 = vmatprep.subr.bf16.mxu0 0
    %606 = vmatpush1.bf16.msra.mxu0 %v468
    %607 = vmatprep.subr.bf16.mxu0 0
    %608 = vmatpush1.bf16.msra.mxu0 %v469
    %609 = vmatprep.subr.bf16.mxu0 0
    %610 = vmatpush1.bf16.msra.mxu0 %v470
    %611 = vmatprep.subr.bf16.mxu0 0
    %612 = vmatpush1.bf16.msra.mxu0 %v471
    %613 = vmatprep.subr.bf16.mxu0 0
    %614 = vmatpush1.bf16.msra.mxu0 %v472
    %615 = vmatprep.subr.bf16.mxu0 0
    %616 = vmatpush1.bf16.msra.mxu0 %v473
    %617 = vmatprep.subr.bf16.mxu0 0
    %618 = vmatpush1.bf16.msra.mxu0 %v474
    %619 = vmatprep.mubr.bf16.mxu0 %v188
    %620 = vmatmul.mubr.bf16.gmra.mrb[0].mxu0 %v187
    %v621 = vpop.f32.mrb[0].mxu0
    %v622 = vadd.f32 %v173, %v621
    %v623 = vpop.f32.mrb[0].mxu0
    %v624 = vpop.f32.mrb[0].mxu0
    %v625 = vpop.f32.mrb[0].mxu0
    %626 = vdwg.mxu0
    %627 = vmatprep.subr.bf16.mxu0 0
    %628 = vmatpush1.bf16.msra.mxu0 %v475
    %629 = vmatprep.subr.bf16.mxu0 0
    %630 = vmatpush1.bf16.msra.mxu0 %v476
    %631 = vmatprep.subr.bf16.mxu0 0
    %632 = vmatpush1.bf16.msra.mxu0 %v477
    %633 = vmatprep.subr.bf16.mxu0 0
    %634 = vmatpush1.bf16.msra.mxu0 %v478
    %635 = vmatprep.subr.bf16.mxu0 0
    %636 = vmatpush1.bf16.msra.mxu0 %v479
    %637 = vmatprep.subr.bf16.mxu0 0
    %638 = vmatpush1.bf16.msra.mxu0 %v480
    %639 = vmatprep.subr.bf16.mxu0 0
    %640 = vmatpush1.bf16.msra.mxu0 %v481
    %641 = vmatprep.subr.bf16.mxu0 0
    %642 = vmatpush1.bf16.msra.mxu0 %v482
    %643 = vmatprep.subr.bf16.mxu0 0
    %644 = vmatpush1.bf16.msra.mxu0 %v483
    %645 = vmatprep.subr.bf16.mxu0 0
    %646 = vmatpush1.bf16.msra.mxu0 %v484
    %647 = vmatprep.subr.bf16.mxu0 0
    %648 = vmatpush1.bf16.msra.mxu0 %v485
    %649 = vmatprep.subr.bf16.mxu0 0
    %650 = vmatpush1.bf16.msra.mxu0 %v486
    %651 = vmatprep.subr.bf16.mxu0 0
    %652 = vmatpush1.bf16.msra.mxu0 %v487
    %653 = vmatprep.subr.bf16.mxu0 0
    %654 = vmatpush1.bf16.msra.mxu0 %v488
    %655 = vmatprep.subr.bf16.mxu0 0
    %656 = vmatpush1.bf16.msra.mxu0 %v489
    %657 = vmatprep.subr.bf16.mxu0 0
    %658 = vmatpush1.bf16.msra.mxu0 %v490
    %659 = vmatprep.mubr.bf16.mxu0 %v190
    %660 = vmatmul.mubr.bf16.gmra.mrb[0].mxu0 %v189
    %v661 = vpop.f32.mrb[0].mxu0
    %v662 = vadd.f32 %v622, %v661
    %v663 = vpop.f32.mrb[0].mxu0
    %v664 = vpop.f32.mrb[0].mxu0
    %v665 = vpop.f32.mrb[0].mxu0
    %666 = vdwg.mxu0
    %667 = vmatprep.subr.bf16.mxu0 0
    %668 = vmatpush1.bf16.msra.mxu0 %v491
    %669 = vmatprep.subr.bf16.mxu0 0
    %670 = vmatpush1.bf16.msra.mxu0 %v492
    %671 = vmatprep.subr.bf16.mxu0 0
    %672 = vmatpush1.bf16.msra.mxu0 %v493
    %673 = vmatprep.subr.bf16.mxu0 0
    %674 = vmatpush1.bf16.msra.mxu0 %v494
    %675 = vmatprep.subr.bf16.mxu0 0
    %676 = vmatpush1.bf16.msra.mxu0 %v495
    %677 = vmatprep.subr.bf16.mxu0 0
    %678 = vmatpush1.bf16.msra.mxu0 %v496
    %679 = vmatprep.subr.bf16.mxu0 0
    %680 = vmatpush1.bf16.msra.mxu0 %v497
    %681 = vmatprep.subr.bf16.mxu0 0
    %682 = vmatpush1.bf16.msra.mxu0 %v498
    %683 = vmatprep.subr.bf16.mxu0 0
    %684 = vmatpush1.bf16.msra.mxu0 %v499
    %685 = vmatprep.subr.bf16.mxu0 0
    %686 = vmatpush1.bf16.msra.mxu0 %v500
    %687 = vmatprep.subr.bf16.mxu0 0
    %688 = vmatpush1.bf16.msra.mxu0 %v501
    %689 = vmatprep.subr.bf16.mxu0 0
    %690 = vmatpush1.bf16.msra.mxu0 %v502
    %691 = vmatprep.subr.bf16.mxu0 0
    %692 = vmatpush1.bf16.msra.mxu0 %v503
    %693 = vmatprep.subr.bf16.mxu0 0
    %694 = vmatpush1.bf16.msra.mxu0 %v504
    %695 = vmatprep.subr.bf16.mxu0 0
    %696 = vmatpush1.bf16.msra.mxu0 %v505
    %697 = vmatprep.subr.bf16.mxu0 0
    %698 = vmatpush1.bf16.msra.mxu0 %v506
    %699 = vmatprep.mubr.bf16.mxu0 %v192
    %700 = vmatmul.mubr.bf16.gmra.mrb[0].mxu0 %v191
    %v701 = vpop.f32.mrb[0].mxu0
    %v702 = vadd.f32 %v662, %v701
    %v703 = vpop.f32.mrb[0].mxu0
    %v704 = vpop.f32.mrb[0].mxu0
    %v705 = vpop.f32.mrb[0].mxu0
    %706 = vdwg.mxu0
    %707 = vmatprep.subr.bf16.mxu0 0
    %708 = vmatpush1.bf16.msra.mxu0 %v507
    %709 = vmatprep.subr.bf16.mxu0 0
    %710 = vmatpush1.bf16.msra.mxu0 %v508
    %711 = vmatprep.subr.bf16.mxu0 0
    %712 = vmatpush1.bf16.msra.mxu0 %v509
    %713 = vmatprep.subr.bf16.mxu0 0
    %714 = vmatpush1.bf16.msra.mxu0 %v510
    %715 = vmatprep.subr.bf16.mxu0 0
    %716 = vmatpush1.bf16.msra.mxu0 %v511
    %717 = vmatprep.subr.bf16.mxu0 0
    %718 = vmatpush1.bf16.msra.mxu0 %v512
    %719 = vmatprep.subr.bf16.mxu0 0
    %720 = vmatpush1.bf16.msra.mxu0 %v513
    %721 = vmatprep.subr.bf16.mxu0 0
    %722 = vmatpush1.bf16.msra.mxu0 %v514
    %723 = vmatprep.subr.bf16.mxu0 0
    %724 = vmatpush1.bf16.msra.mxu0 %v515
    %725 = vmatprep.subr.bf16.mxu0 0
    %726 = vmatpush1.bf16.msra.mxu0 %v516
    %727 = vmatprep.subr.bf16.mxu0 0
    %728 = vmatpush1.bf16.msra.mxu0 %v517
    %729 = vmatprep.subr.bf16.mxu0 0
    %730 = vmatpush1.bf16.msra.mxu0 %v518
    %731 = vmatprep.subr.bf16.mxu0 0
    %732 = vmatpush1.bf16.msra.mxu0 %v519
    %733 = vmatprep.subr.bf16.mxu0 0
    %734 = vmatpush1.bf16.msra.mxu0 %v520
    %735 = vmatprep.subr.bf16.mxu0 0
    %736 = vmatpush1.bf16.msra.mxu0 %v521
    %737 = vmatprep.subr.bf16.mxu0 0
    %738 = vmatpush1.bf16.msra.mxu0 %v522
    %739 = vmatprep.mubr.bf16.mxu0 %v194
    %740 = vmatmul.mubr.bf16.gmra.mrb[0].mxu0 %v193
    %v741 = vpop.f32.mrb[0].mxu0
    %v742 = vadd.f32 %v702, %v741
    %v743 = vpop.f32.mrb[0].mxu0
    %v744 = vpop.f32.mrb[0].mxu0
    %v745 = vpop.f32.mrb[0].mxu0
    %746 = vdwg.mxu0
    %v747 = vmax.f32 %v742, 0.0
    %v748 = vpack.c.bf16 %v747, %v747
    %v749 = vld [vmem:[%s3] sm:$0xf]
    %v750 = vld [vmem:[%s3 + $0x4] sm:$0xf]
    %v751 = vld [vmem:[%s3 + $0x8] sm:$0xf]
    %v752 = vld [vmem:[%s3 + $0xc] sm:$0xf]
    %v753 = vld [vmem:[%s3 + $0x10] sm:$0xf]
    %v754 = vld [vmem:[%s3 + $0x14] sm:$0xf]
    %v755 = vld [vmem:[%s3 + $0x18] sm:$0xf]
    %v756 = vld [vmem:[%s3 + $0x1c] sm:$0xf]
    %v757 = vld [vmem:[%s3 + $0x20] sm:$0xf]
    %v758 = vld [vmem:[%s3 + $0x24] sm:$0xf]
    %v759 = vld [vmem:[%s3 + $0x28] sm:$0xf]
    %v760 = vld [vmem:[%s3 + $0x2c] sm:$0xf]
    %v761 = vld [vmem:[%s3 + $0x30] sm:$0xf]
    %v762 = vld [vmem:[%s3 + $0x34] sm:$0xf]
    %v763 = vld [vmem:[%s3 + $0x38] sm:$0xf]
    %v764 = vld [vmem:[%s3 + $0x3c] sm:$0xf]
    %v765 = vld [vmem:[%s4] sm:$0x1]
    %v767 = vlaneseq
    %v768 = vshrl.u32 %v767, 7
    %v769 = vsub.s32 0, %v768
    %v770 = vrot.slane %v765, %v769
    %v788 = vunpack.c.l.b16 %v749
    %v789 = vunpack.c.l.b16 %v750
    %v790 = vunpack.c.l.b16 %v751
    %v791 = vunpack.c.l.b16 %v752
    %v792 = vunpack.c.l.b16 %v753
    %v793 = vunpack.c.l.b16 %v754
    %v794 = vunpack.c.l.b16 %v755
    %v795 = vunpack.c.l.b16 %v756
    %v796 = vunpack.c.l.b16 %v757
    %v797 = vunpack.c.l.b16 %v758
    %v798 = vunpack.c.l.b16 %v759
    %v799 = vunpack.c.l.b16 %v760
    %v800 = vunpack.c.l.b16 %v761
    %v801 = vunpack.c.l.b16 %v762
    %v802 = vunpack.c.l.b16 %v763
    %v803 = vunpack.c.l.b16 %v764
    %v804 = vpack.c.b16 %v789, %v788
    %v805 = vpack.c.b16 %v791, %v790
    %v806 = vpack.c.b16 %v793, %v792
    %v807 = vpack.c.b16 %v795, %v794
    %v808 = vpack.c.b16 %v797, %v796
    %v809 = vpack.c.b16 %v799, %v798
    %v810 = vpack.c.b16 %v801, %v800
    %v811 = vpack.c.b16 %v803, %v802
    %820 = vmatprep.subr.bf16.mxu0 0
    %821 = vmatpush1.bf16.msra.mxu0 %v804
    %822 = vmatprep.subr.bf16.mxu0 0
    %823 = vmatpush1.bf16.msra.mxu0 %v805
    %824 = vmatprep.subr.bf16.mxu0 0
    %825 = vmatpush1.bf16.msra.mxu0 %v806
    %826 = vmatprep.subr.bf16.mxu0 0
    %827 = vmatpush1.bf16.msra.mxu0 %v807
    %828 = vmatprep.subr.bf16.mxu0 0
    %829 = vmatpush1.bf16.msra.mxu0 %v808
    %830 = vmatprep.subr.bf16.mxu0 0
    %831 = vmatpush1.bf16.msra.mxu0 %v809
    %832 = vmatprep.subr.bf16.mxu0 0
    %833 = vmatpush1.bf16.msra.mxu0 %v810
    %834 = vmatprep.subr.bf16.mxu0 0
    %835 = vmatpush1.bf16.msra.mxu0 %v811
    %836 = vmatprep.subr.bf16.mxu0 0
    %837 = vmatpush1.bf16.msra.mxu0 0
    %838 = vmatprep.subr.bf16.mxu0 0
    %839 = vmatpush1.bf16.msra.mxu0 0
    %840 = vmatprep.subr.bf16.mxu0 0
    %841 = vmatpush1.bf16.msra.mxu0 0
    %842 = vmatprep.subr.bf16.mxu0 0
    %843 = vmatpush1.bf16.msra.mxu0 0
    %844 = vmatprep.subr.bf16.mxu0 0
    %845 = vmatpush1.bf16.msra.mxu0 0
    %846 = vmatprep.subr.bf16.mxu0 0
    %847 = vmatpush1.bf16.msra.mxu0 0
    %848 = vmatprep.subr.bf16.mxu0 0
    %849 = vmatpush1.bf16.msra.mxu0 0
    %850 = vmatprep.subr.bf16.mxu0 0
    %851 = vmatpush1.bf16.msra.mxu0 0
    %852 = vmatprep.mubr.bf16.mxu0 0
    %853 = vmatmul.mubr.bf16.gmra.mrb[0].mxu0 %v748
    %v854 = vpop.f32.mrb[0].mxu0
    %v855 = vadd.f32 %v770, %v854
    %v856 = vpop.f32.mrb[0].mxu0
    %v857 = vpop.f32.mrb[0].mxu0
    %v858 = vpop.f32.mrb[0].mxu0
    %859 = vdwg.mxu0
    %860 = vst [vmem:[#allocation5] sm:$0xff] %v855
    // Predicated region
    $region26: #{net_forward.1} parent=1 // pred_check
      _
    $region27: #{net_forward.1} parent=1 // pred_check_branch
      %862 = sbr.rel (0) target = $region29
    $region28: #{net_forward.1} parent=1 // pred_region
      %s864 = ssub.s32 128, 128
      %865 = vsyncadd [#allocation4], %s864
      %s867 = sshll.u32 [#allocation5], 4
      %s868 = int_to_ptr.vmem [resolvable:$true] %s867
      %870 = dma.vmem_to_hbm [thread:$0]  %s868, 128, %s5, [#allocation4]
    $region29: #{net_forward.1} parent=1 // pred_fallthru
      _
    // Predicated region
    $region30: #{net_forward.1} parent=1 // pred_check
      _
    $region31: #{net_forward.1} parent=1 // pred_check_branch
      %872 = sbr.rel (0) target = $region33
    $region32: #{net_forward.1} parent=1 // pred_region
      %873 = dma.done [#allocation4], 128
    $region33: #{net_forward.1} parent=1 // pred_fallthru
      _
    %874 = vsyncpa [#allocation3], 1
    %875 = vsyncpa [#allocation4], 1

</llo_original>
